<compile_context>
chip_gen: v6e
topology: v6e:2x2x1
jax: 0.10.0
libtpu: 0.0.40
codegen_flags: <defaults>
</compile_context>

<pallas_src>
import functools
import math

import jax
import jax.numpy as jnp
from jax import lax
from jax.experimental import pallas as pl
from jax.experimental.pallas import tpu as pltpu

_INV_SQRT_2PI = 1.0 / math.sqrt(2.0 * math.pi)
_INV_SQRT_2 = 1.0 / math.sqrt(2.0)

_ROW_CHUNK = 32          # rows per in-kernel chunk (keeps intermediates in-register)
_VMEM_BUDGET = 24 << 20  # stay well under the 32 MiB scoped default (v7x: 64 MiB phys)


def _erf_signed_and_q(x, c):
    """Signed erf(x) (A&S 7.1.26, |err| < 1.5e-7) and q = c * exp(-x^2).

    One shared EUP exp: the erf tail factor exp(-x^2) is also the (scaled)
    Gaussian pdf since x = z/sqrt(2).  The inner reciprocal uses the EUP approx
    slot refined by one Newton step (2 VPU ops) so its ~2^-12 error does not
    leak through the Horner polynomial.
    """
    e = jnp.exp(-(x * x))                       # shared EUP exp
    q = c * e                                   # = bsig * phi(z), c = bsig/sqrt(2*pi)
    xa = jnp.abs(x)
    d = 1.0 + 0.3275911 * xa
    t0 = pl.reciprocal(d, approx=True)          # EUP slot (free: kernel is VALU-bound)
    t = t0 * (2.0 - d * t0)                     # Newton refinement -> ~2^-24 rel err
    poly = t * (0.254829592 + t * (-0.284496736 + t * (1.421413741
               + t * (-1.453152027 + t * 1.061405429))))
    g = 1.0 - poly * e                          # erf(|x|)
    erf_s = jnp.where(x >= 0.0, g, -g)          # signed erf, single select
    return erf_s, q


def continuous_sparsemax_kernel(scal_ref, consts_ref, out_ref, *, row_chunk):
    # Grid-invariant basis constants, packed into one (8, Npad) tile.
    bmu = consts_ref[0:1, :]                    # basis means
    bm2ps2 = consts_ref[1:2, :]                 # bmu^2 + bsig^2
    inv_s2 = consts_ref[2:3, :]                 # 1 / (bsig * sqrt(2))
    c = consts_ref[3:4, :]                      # bsig / sqrt(2*pi)

    n_chunks = out_ref.shape[0] // row_chunk

    def body(ci, carry):
        r0 = pl.multiple_of(ci * row_chunk, row_chunk)
        scal = scal_ref[pl.ds(r0, row_chunk), :]     # [rc, 8] packed per-row scalars
        t1 = scal[:, 0:1]
        t2 = scal[:, 1:2]
        A = scal[:, 2:3]
        left = scal[:, 3:4]
        right = scal[:, 4:5]

        x_r = (right - bmu) * inv_s2                 # [rc, Npad], x = z/sqrt(2)
        x_l = (left - bmu) * inv_s2
        erf_r, q_r = _erf_signed_and_q(x_r, c)
        erf_l, q_l = _erf_signed_and_q(x_l, c)

        u = 0.5 * (erf_r - erf_l)                    # int psi_j
        V0 = bmu * u - (q_r - q_l)                   # int t * psi_j
        V1 = bm2ps2 * u - ((right + bmu) * q_r - (left + bmu) * q_l)  # int t^2 * psi_j

        # r = theta @ V - A * u as explicit VPU FMAs (no MXU for K=2).
        out_ref[pl.ds(r0, row_chunk), :] = t1 * V0 + t2 * V1 - A * u
        return carry

    lax.fori_loop(0, n_chunks, body, 0)


def _round_up(x, m):
    return ((x + m - 1) // m) * m


def _pick_block_b(B, n_pad, row_chunk, vmem_budget_bytes):
    # Double-buffered out tile + lane-padded [block_b, 8]->[block_b,128] scal tile,
    # plus the (tiny) double-buffered consts tile.
    per_row_bytes = 2 * (n_pad * 4 + 128 * 4)
    budget = max(0, vmem_budget_bytes - 2 * 8 * n_pad * 4)
    cap = max(8, budget // per_row_bytes)
    cap = min(2048, cap)
    # Keep >=2 grid steps when B allows it (v7x: 2 TensorCores), big otherwise.
    blk = max(8, min(cap, _round_up(pl.cdiv(B, 2), 8)))
    if blk >= row_chunk:
        blk = _round_up(blk, row_chunk)
    return blk


def continuous_sparsemax(theta, basis_mu, basis_sigma, *, block_b=None):
    B = theta.shape[0]
    N = basis_mu.shape[0]
    n_pad = _round_up(N, 128)                   # lane-dense output (unmasked vst)

    theta = theta.astype(jnp.float32)
    t1 = theta[:, 0]
    t2 = theta[:, 1]

    # Per-row scalars of the truncated-parabola density (PyTorch forward),
    # hoisted out of the kernel (tiny [B]-sized transcendentals).
    sigma_sq = -0.5 / t2
    sigma = jnp.sqrt(sigma_sq)
    mu = t1 * sigma_sq
    A = -0.5 * (3.0 / (2.0 * sigma)) ** (2.0 / 3.0)
    supp = jnp.sqrt(-2.0 * A) * sigma           # support half-width a
    A = A + mu * mu / (2.0 * sigma_sq)
    left = mu - supp
    right = mu + supp
    zero = jnp.zeros_like(t1)
    scal = jnp.stack([t1, t2, A, left, right, zero, zero, zero], axis=1)  # [B, 8]

    # Grid-invariant basis constants, packed into a single (8, n_pad) f32 array.
    # Padded columns use bsig=1 so all math stays finite; they are sliced off.
    pad = n_pad - N
    bmu_p = jnp.pad(basis_mu.astype(jnp.float32), (0, pad))
    bsig_p = jnp.pad(basis_sigma.astype(jnp.float32), (0, pad), constant_values=1.0)
    consts = jnp.zeros((8, n_pad), jnp.float32)
    consts = consts.at[0].set(bmu_p)
    consts = consts.at[1].set(bmu_p * bmu_p + bsig_p * bsig_p)
    consts = consts.at[2].set(_INV_SQRT_2 / bsig_p)
    consts = consts.at[3].set(_INV_SQRT_2PI * bsig_p)

    row_chunk = _ROW_CHUNK
    if block_b is None:
        block_b = _pick_block_b(B, n_pad, row_chunk, _VMEM_BUDGET)
    row_chunk = min(row_chunk, block_b)
    if block_b % row_chunk != 0:
        row_chunk = 8                            # block_b is always a multiple of 8

    # NOTE: if B % block_b != 0, the padded tail rows compute garbage that is
    # never written back (all math is row-local, so nothing leaks across rows).
    out = pl.pallas_call(
        functools.partial(continuous_sparsemax_kernel, row_chunk=row_chunk),
        out_shape=jax.ShapeDtypeStruct((B, n_pad), jnp.float32),
        grid=(pl.cdiv(B, block_b),),
        in_specs=[
            pl.BlockSpec((block_b, 8), lambda i: (i, 0)),
            pl.BlockSpec((8, n_pad), lambda i: (0, 0)),
        ],
        out_specs=pl.BlockSpec((block_b, n_pad), lambda i: (i, 0)),
        compiler_params=pltpu.CompilerParams(dimension_semantics=("parallel",)),
    )(scal, consts)
    return out[:, :N]


def continuous_sparsemax_ref(theta, basis_mu, basis_sigma):
    """Pure-JAX reference (mirrors the PyTorch forward with Gaussian psi)."""
    from jax.scipy.special import erf
    t1 = theta[:, 0:1]
    t2 = theta[:, 1:2]
    sigma = jnp.sqrt(-0.5 / t2)
    mu = t1 * sigma ** 2
    A = -0.5 * (3.0 / (2.0 * sigma)) ** (2.0 / 3.0)
    a = jnp.sqrt(-2.0 * A) * sigma
    A = A + mu ** 2 / (2.0 * sigma ** 2)
    left = mu - a
    right = mu + a
    bmu = basis_mu[None, :]
    bsig = basis_sigma[None, :]

    def Phi(z):
        return 0.5 * (1.0 + erf(z / jnp.sqrt(2.0)))

    def phi(z):
        return jnp.exp(-0.5 * z * z) / jnp.sqrt(2.0 * jnp.pi)

    zr = (right - bmu) / bsig
    zl = (left - bmu) / bsig
    u = Phi(zr) - Phi(zl)
    V0 = bmu * u - bsig * (phi(zr) - phi(zl))
    V1 = ((bmu ** 2 + bsig ** 2) * u
          - bsig * (right + bmu) * phi(zr)
          + bsig * (left + bmu) * phi(zl))
    return t1 * V0 + t2 * V1 - A * u


if __name__ == "__main__":
    B = 8          # batch of attention queries
    N = 128        # number of Gaussian basis functions (deterministic "parameters")

    key = jax.random.PRNGKey(0)
    k_mu, k_sig = jax.random.split(key)

    # Valid canonical parameters: theta = [mu/sigma^2, -1/(2 sigma^2)], sigma > 0.
    loc = jax.random.uniform(k_mu, (B,), minval=0.0, maxval=1.0)
    scale = jax.random.uniform(k_sig, (B,), minval=0.1, maxval=0.5)
    theta = jnp.stack([loc / scale ** 2, -1.0 / (2.0 * scale ** 2)], axis=1)
    theta = theta.astype(jnp.float32)

    # Deterministic basis-function parameters (the module's psi argument).
    basis_mu = jnp.linspace(0.0, 1.0, N, dtype=jnp.float32)
    basis_sigma = jnp.full((N,), 0.1, dtype=jnp.float32)

    r = continuous_sparsemax(theta, basis_mu, basis_sigma)
    jax.block_until_ready(r)

    r_ref = continuous_sparsemax_ref(theta, basis_mu, basis_sigma)
    assert r.shape == (B, N)
    # Error budget: A&S erf base error (1.5e-7) amplified by |theta|,|A| ~ 1e2
    # -> ~1e-4 worst case; the Newton-refined reciprocal contributes negligibly.
    assert jnp.allclose(r, r_ref, rtol=1e-3, atol=2e-3), (
        float(jnp.max(jnp.abs(r - r_ref))))
    print("KERNEL_OK")
</pallas_src>

<mosaic_0001>
module attributes {stable_mosaic.version = 11 : i64} {
  func.func @continuous_sparsemax_kernel(%arg0: i32, %arg1: memref<8x8xf32, #tpu.memory_space<vmem>>, %arg2: memref<8x128xf32, #tpu.memory_space<vmem>>, %arg3: memref<8x128xf32, #tpu.memory_space<vmem>>) attributes {dimension_semantics = [#tpu.dimension_semantics<parallel>], iteration_bounds = array<i64: 1>, scalar_prefetch = 0 : i64, scratch_operands = 0 : i64, tpu.core_type = #tpu.core_type<tc>, window_params = [{transform_indices = @transform_0, window_bounds = array<i64: 8, 8>}, {pipeline_mode = #tpu.pipeline_mode<synchronous>, transform_indices = @transform_1, window_bounds = array<i64: 8, 128>}, {transform_indices = @transform_2, window_bounds = array<i64: 8, 128>}]} {
    %c0 = arith.constant 0 : index
    %c0_0 = arith.constant 0 : index
    %0 = vector.load %arg2[%c0, %c0_0] : memref<8x128xf32, #tpu.memory_space<vmem>>, vector<1x128xf32>
    %c1 = arith.constant 1 : index
    %c0_1 = arith.constant 0 : index
    %1 = vector.load %arg2[%c1, %c0_1] : memref<8x128xf32, #tpu.memory_space<vmem>>, vector<1x128xf32>
    %c2 = arith.constant 2 : index
    %c0_2 = arith.constant 0 : index
    %2 = vector.load %arg2[%c2, %c0_2] : memref<8x128xf32, #tpu.memory_space<vmem>>, vector<1x128xf32>
    %c3 = arith.constant 3 : index
    %c0_3 = arith.constant 0 : index
    %3 = vector.load %arg2[%c3, %c0_3] : memref<8x128xf32, #tpu.memory_space<vmem>>, vector<1x128xf32>
    %c0_i32 = arith.constant 0 : i32
    %c8_i32 = arith.constant 8 : i32
    %4 = arith.muli %c0_i32, %c8_i32 : i32
    %5 = tpu.assume_multiple %4, 8 : i32
    %6 = arith.index_cast %5 : i32 to index
    %c0_4 = arith.constant 0 : index
    %7 = vector.load %arg1[%6, %c0_4] : memref<8x8xf32, #tpu.memory_space<vmem>>, vector<8x8xf32>
    %8 = vector.extract_strided_slice %7 {offsets = [0, 0], sizes = [8, 1], strides = [1, 1]} : vector<8x8xf32> to vector<8x1xf32>
    %9 = vector.extract_strided_slice %7 {offsets = [0, 1], sizes = [8, 1], strides = [1, 1]} : vector<8x8xf32> to vector<8x1xf32>
    %10 = vector.extract_strided_slice %7 {offsets = [0, 2], sizes = [8, 1], strides = [1, 1]} : vector<8x8xf32> to vector<8x1xf32>
    %11 = vector.extract_strided_slice %7 {offsets = [0, 3], sizes = [8, 1], strides = [1, 1]} : vector<8x8xf32> to vector<8x1xf32>
    %12 = vector.extract_strided_slice %7 {offsets = [0, 4], sizes = [8, 1], strides = [1, 1]} : vector<8x8xf32> to vector<8x1xf32>
    %13 = vector.broadcast %12 : vector<8x1xf32> to vector<8x128xf32>
    %14 = vector.broadcast %0 : vector<1x128xf32> to vector<8x128xf32>
    %15 = arith.subf %13, %14 : vector<8x128xf32>
    %16 = vector.broadcast %2 : vector<1x128xf32> to vector<8x128xf32>
    %17 = arith.mulf %15, %16 : vector<8x128xf32>
    %18 = vector.broadcast %11 : vector<8x1xf32> to vector<8x128xf32>
    %19 = vector.broadcast %0 : vector<1x128xf32> to vector<8x128xf32>
    %20 = arith.subf %18, %19 : vector<8x128xf32>
    %21 = vector.broadcast %2 : vector<1x128xf32> to vector<8x128xf32>
    %22 = arith.mulf %20, %21 : vector<8x128xf32>
    %23 = arith.mulf %17, %17 : vector<8x128xf32>
    %cst = arith.constant 0.000000e+00 : f32
    %24 = vector.broadcast %cst : f32 to vector<8x128xf32>
    %25 = arith.subf %24, %23 : vector<8x128xf32>
    %26 = math.exp %25 : vector<8x128xf32>
    %27 = vector.broadcast %3 : vector<1x128xf32> to vector<8x128xf32>
    %28 = arith.mulf %27, %26 : vector<8x128xf32>
    %29 = math.absf %17 : vector<8x128xf32>
    %cst_5 = arith.constant 0.327591091 : f32
    %30 = vector.broadcast %cst_5 : f32 to vector<8x128xf32>
    %31 = arith.mulf %30, %29 : vector<8x128xf32>
    %cst_6 = arith.constant 1.000000e+00 : f32
    %32 = vector.broadcast %cst_6 : f32 to vector<8x128xf32>
    %33 = arith.addf %32, %31 : vector<8x128xf32>
    %34 = tpu.reciprocal %33 {approx = true} : vector<8x128xf32> -> vector<8x128xf32>
    %35 = arith.mulf %33, %34 : vector<8x128xf32>
    %cst_7 = arith.constant 2.000000e+00 : f32
    %36 = vector.broadcast %cst_7 : f32 to vector<8x128xf32>
    %37 = arith.subf %36, %35 : vector<8x128xf32>
    %38 = arith.mulf %34, %37 : vector<8x128xf32>
    %cst_8 = arith.constant 1.06140542 : f32
    %39 = vector.broadcast %cst_8 : f32 to vector<8x128xf32>
    %40 = arith.mulf %38, %39 : vector<8x128xf32>
    %cst_9 = arith.constant -1.45315206 : f32
    %41 = vector.broadcast %cst_9 : f32 to vector<8x128xf32>
    %42 = arith.addf %41, %40 : vector<8x128xf32>
    %43 = arith.mulf %38, %42 : vector<8x128xf32>
    %cst_10 = arith.constant 1.42141378 : f32
    %44 = vector.broadcast %cst_10 : f32 to vector<8x128xf32>
    %45 = arith.addf %44, %43 : vector<8x128xf32>
    %46 = arith.mulf %38, %45 : vector<8x128xf32>
    %cst_11 = arith.constant -0.284496725 : f32
    %47 = vector.broadcast %cst_11 : f32 to vector<8x128xf32>
    %48 = arith.addf %47, %46 : vector<8x128xf32>
    %49 = arith.mulf %38, %48 : vector<8x128xf32>
    %cst_12 = arith.constant 0.254829586 : f32
    %50 = vector.broadcast %cst_12 : f32 to vector<8x128xf32>
    %51 = arith.addf %50, %49 : vector<8x128xf32>
    %52 = arith.mulf %38, %51 : vector<8x128xf32>
    %53 = arith.mulf %52, %26 : vector<8x128xf32>
    %cst_13 = arith.constant 1.000000e+00 : f32
    %54 = vector.broadcast %cst_13 : f32 to vector<8x128xf32>
    %55 = arith.subf %54, %53 : vector<8x128xf32>
    %cst_14 = arith.constant 0.000000e+00 : f32
    %56 = vector.broadcast %cst_14 : f32 to vector<8x128xf32>
    %57 = arith.cmpf oge, %17, %56 : vector<8x128xf32>
    %cst_15 = arith.constant 0.000000e+00 : f32
    %58 = vector.broadcast %cst_15 : f32 to vector<8x128xf32>
    %59 = arith.subf %58, %55 : vector<8x128xf32>
    %60 = arith.select %57, %55, %59 : vector<8x128xi1>, vector<8x128xf32>
    %61 = arith.mulf %22, %22 : vector<8x128xf32>
    %cst_16 = arith.constant 0.000000e+00 : f32
    %62 = vector.broadcast %cst_16 : f32 to vector<8x128xf32>
    %63 = arith.subf %62, %61 : vector<8x128xf32>
    %64 = math.exp %63 : vector<8x128xf32>
    %65 = vector.broadcast %3 : vector<1x128xf32> to vector<8x128xf32>
    %66 = arith.mulf %65, %64 : vector<8x128xf32>
    %67 = math.absf %22 : vector<8x128xf32>
    %cst_17 = arith.constant 0.327591091 : f32
    %68 = vector.broadcast %cst_17 : f32 to vector<8x128xf32>
    %69 = arith.mulf %68, %67 : vector<8x128xf32>
    %cst_18 = arith.constant 1.000000e+00 : f32
    %70 = vector.broadcast %cst_18 : f32 to vector<8x128xf32>
    %71 = arith.addf %70, %69 : vector<8x128xf32>
    %72 = tpu.reciprocal %71 {approx = true} : vector<8x128xf32> -> vector<8x128xf32>
    %73 = arith.mulf %71, %72 : vector<8x128xf32>
    %cst_19 = arith.constant 2.000000e+00 : f32
    %74 = vector.broadcast %cst_19 : f32 to vector<8x128xf32>
    %75 = arith.subf %74, %73 : vector<8x128xf32>
    %76 = arith.mulf %72, %75 : vector<8x128xf32>
    %cst_20 = arith.constant 1.06140542 : f32
    %77 = vector.broadcast %cst_20 : f32 to vector<8x128xf32>
    %78 = arith.mulf %76, %77 : vector<8x128xf32>
    %cst_21 = arith.constant -1.45315206 : f32
    %79 = vector.broadcast %cst_21 : f32 to vector<8x128xf32>
    %80 = arith.addf %79, %78 : vector<8x128xf32>
    %81 = arith.mulf %76, %80 : vector<8x128xf32>
    %cst_22 = arith.constant 1.42141378 : f32
    %82 = vector.broadcast %cst_22 : f32 to vector<8x128xf32>
    %83 = arith.addf %82, %81 : vector<8x128xf32>
    %84 = arith.mulf %76, %83 : vector<8x128xf32>
    %cst_23 = arith.constant -0.284496725 : f32
    %85 = vector.broadcast %cst_23 : f32 to vector<8x128xf32>
    %86 = arith.addf %85, %84 : vector<8x128xf32>
    %87 = arith.mulf %76, %86 : vector<8x128xf32>
    %cst_24 = arith.constant 0.254829586 : f32
    %88 = vector.broadcast %cst_24 : f32 to vector<8x128xf32>
    %89 = arith.addf %88, %87 : vector<8x128xf32>
    %90 = arith.mulf %76, %89 : vector<8x128xf32>
    %91 = arith.mulf %90, %64 : vector<8x128xf32>
    %cst_25 = arith.constant 1.000000e+00 : f32
    %92 = vector.broadcast %cst_25 : f32 to vector<8x128xf32>
    %93 = arith.subf %92, %91 : vector<8x128xf32>
    %cst_26 = arith.constant 0.000000e+00 : f32
    %94 = vector.broadcast %cst_26 : f32 to vector<8x128xf32>
    %95 = arith.cmpf oge, %22, %94 : vector<8x128xf32>
    %cst_27 = arith.constant 0.000000e+00 : f32
    %96 = vector.broadcast %cst_27 : f32 to vector<8x128xf32>
    %97 = arith.subf %96, %93 : vector<8x128xf32>
    %98 = arith.select %95, %93, %97 : vector<8x128xi1>, vector<8x128xf32>
    %99 = arith.subf %60, %98 : vector<8x128xf32>
    %cst_28 = arith.constant 5.000000e-01 : f32
    %100 = vector.broadcast %cst_28 : f32 to vector<8x128xf32>
    %101 = arith.mulf %100, %99 : vector<8x128xf32>
    %102 = vector.broadcast %0 : vector<1x128xf32> to vector<8x128xf32>
    %103 = arith.mulf %102, %101 : vector<8x128xf32>
    %104 = arith.subf %28, %66 : vector<8x128xf32>
    %105 = arith.subf %103, %104 : vector<8x128xf32>
    %106 = vector.broadcast %1 : vector<1x128xf32> to vector<8x128xf32>
    %107 = arith.mulf %106, %101 : vector<8x128xf32>
    %108 = vector.broadcast %12 : vector<8x1xf32> to vector<8x128xf32>
    %109 = vector.broadcast %0 : vector<1x128xf32> to vector<8x128xf32>
    %110 = arith.addf %108, %109 : vector<8x128xf32>
    %111 = arith.mulf %110, %28 : vector<8x128xf32>
    %112 = vector.broadcast %11 : vector<8x1xf32> to vector<8x128xf32>
    %113 = vector.broadcast %0 : vector<1x128xf32> to vector<8x128xf32>
    %114 = arith.addf %112, %113 : vector<8x128xf32>
    %115 = arith.mulf %114, %66 : vector<8x128xf32>
    %116 = arith.subf %111, %115 : vector<8x128xf32>
    %117 = arith.subf %107, %116 : vector<8x128xf32>
    %118 = vector.broadcast %8 : vector<8x1xf32> to vector<8x128xf32>
    %119 = arith.mulf %118, %105 : vector<8x128xf32>
    %120 = vector.broadcast %9 : vector<8x1xf32> to vector<8x128xf32>
    %121 = arith.mulf %120, %117 : vector<8x128xf32>
    %122 = arith.addf %119, %121 : vector<8x128xf32>
    %123 = vector.broadcast %10 : vector<8x1xf32> to vector<8x128xf32>
    %124 = arith.mulf %123, %101 : vector<8x128xf32>
    %125 = arith.subf %122, %124 : vector<8x128xf32>
    %126 = arith.index_cast %5 : i32 to index
    %c0_29 = arith.constant 0 : index
    %127 = vector.load %arg3[%126, %c0_29] : memref<8x128xf32, #tpu.memory_space<vmem>>, vector<8x128xf32>
    tpu.vector_store %arg3[%126, %c0_29], %125 {strides = array<i32>} : memref<8x128xf32, #tpu.memory_space<vmem>>, vector<8x128xf32>,
    %c1_i32 = arith.constant 1 : i32
    return
  }
  func.func @transform_0(%arg0: i32) -> (i32, i32) {
    %c0_i32 = arith.constant 0 : i32
    %c0_i32_0 = arith.constant 0 : i32
    return %arg0, %c0_i32 : i32, i32
  }
  func.func @transform_1(%arg0: i32) -> (i32, i32) {
    %c0_i32 = arith.constant 0 : i32
    %c0_i32_0 = arith.constant 0 : i32
    %c0_i32_1 = arith.constant 0 : i32
    return %c0_i32, %c0_i32_0 : i32, i32
  }
  func.func @transform_2(%arg0: i32) -> (i32, i32) {
    %c0_i32 = arith.constant 0 : i32
    %c0_i32_0 = arith.constant 0 : i32
    return %arg0, %c0_i32 : i32, i32
  }
}

</mosaic_0001>

<llo_original>
// kernel: tpu_custom_call.1
$region0: #{tpu_custom_call.1}
  #allocation0 [shape = 'u32[]', space=smem, size = 0x4, offset = 0x4, fixed_abs, tag = 'smem constant byte address 0x4 - core index']
  #allocation1 [shape = 'u32[144,128]{1,0:T(1,128)}', space=vmem, size = 0x12000, scoped, tag = 'internal scratch']
  %s0 = inlined_call_operand.hbm [shape: f32[8,8], index: 0, kind: input, shape index: {}]
  %s1 = inlined_call_operand.hbm [shape: f32[8,128], index: 1, kind: input, shape index: {}]
  %s2 = inlined_call_operand.hbm [shape: f32[8,128], index: 2, kind: output, shape index: {}]
  %s3 = sld [smem:[#allocation0]]
  $region26: #{tpu_custom_call.1} parent=0
    _
  %s5 = ssub.s32 1, %s3
  %s6 = scalar_select 0, %s5, %s3
  $region1: #{tpu_custom_call.1} parent=0
    #allocation2 [shape = 'u8[4096]{0}', space=vmem, size = 0x1000, scoped, tag = 'input window, operand 0, single buffered']
    #allocation3 [shape = 's32[1]{0}', space=sflag, size = 0x4, scoped, tag = 'scoped memory for tpu_custom_call.1']
    #allocation4 [shape = 's32[1]{0}', space=sflag, size = 0x4, scoped, tag = 'scoped memory for tpu_custom_call.1']
    #allocation5 [shape = 'u8[4096]{0}', space=vmem, size = 0x1000, scoped, tag = 'input window, operand 1, single buffered']
    #allocation6 [shape = 's32[1]{0}', space=sflag, size = 0x4, scoped, tag = 'scoped memory for tpu_custom_call.1']
    #allocation7 [shape = 'u8[4096]{0}', space=vmem, size = 0x1000, scoped, tag = 'output window, operand 0, single buffered']
    %7 = vsyncpa [#allocation3], 0
    %8 = vsyncpa [#allocation6], 0
    %9 = vsyncpa [#allocation4], 0
    // Predicated region
    $region2: #{tpu_custom_call.1} parent=1 // pred_check
      _
    $region3: #{tpu_custom_call.1} parent=1 // pred_check_branch
      %11 = sbr.rel (0) target = $region5
    $region4: #{tpu_custom_call.1} parent=1 // pred_region
      %s13 = ssub.s32 128, 128
      %14 = vsyncadd [#allocation3], %s13
      %s16 = sshll.u32 [#allocation2], 4
      %s17 = int_to_ptr.vmem [resolvable:$true] %s16
      %19 = dma.hbm_to_vmem [thread:$0]  %s0, 128, %s17, [#allocation3]
    $region5: #{tpu_custom_call.1} parent=1 // pred_fallthru
      _
    // Predicated region
    $region6: #{tpu_custom_call.1} parent=1 // pred_check
      _
    $region7: #{tpu_custom_call.1} parent=1 // pred_check_branch
      %21 = sbr.rel (0) target = $region9
    $region8: #{tpu_custom_call.1} parent=1 // pred_region
      %s23 = ssub.s32 128, 128
      %24 = vsyncadd [#allocation6], %s23
      %s26 = sshll.u32 [#allocation5], 4
      %s27 = int_to_ptr.vmem [resolvable:$true] %s26
      %29 = dma.hbm_to_vmem [thread:$0]  %s1, 128, %s27, [#allocation6]
    $region9: #{tpu_custom_call.1} parent=1 // pred_fallthru
      _
    // Predicated region
    $region10: #{tpu_custom_call.1} parent=1 // pred_check
      _
    $region11: #{tpu_custom_call.1} parent=1 // pred_check_branch
      %31 = sbr.rel (0) target = $region13
    $region12: #{tpu_custom_call.1} parent=1 // pred_region
      %32 = dma.done [#allocation3], 128
    $region13: #{tpu_custom_call.1} parent=1 // pred_fallthru
      _
    // Predicated region
    $region14: #{tpu_custom_call.1} parent=1 // pred_check
      _
    $region15: #{tpu_custom_call.1} parent=1 // pred_check_branch
      %34 = sbr.rel (0) target = $region17
    $region16: #{tpu_custom_call.1} parent=1 // pred_region
      %35 = dma.done [#allocation6], 128
    $region17: #{tpu_custom_call.1} parent=1 // pred_fallthru
      _
    %v36 = vld [vmem:[#allocation5] sm:$0x1]
    %v37 = vld [vmem:[#allocation5 + $0x1] sm:$0x1]
    %v38 = vld [vmem:[#allocation5 + $0x2] sm:$0x1]
    %v39 = vld [vmem:[#allocation5 + $0x3] sm:$0x1]
    %v40 = vld [vmem:[#allocation2] sm:$0xff]
    %42 = vset.pattern.permute.xlu0 4
    %43 = vperm.xlu0 %42, %v40
    %v44 = vpop.permute.xlu0 %43
    %v46 = vlaneseq
    %v47 = vshrl.u32 %v46, 7
    %v48 = vsub.s32 0, %v47
    %v49 = vrot.slane %v36, %v48
    %v50 = vsub.f32 %v44, %v49
    %v51 = vlaneseq
    %v52 = vshrl.u32 %v51, 7
    %v53 = vsub.s32 0, %v52
    %v54 = vrot.slane %v38, %v53
    %v55 = vmul.f32 %v50, %v54
    %56 = vset.pattern.permute.xlu0 3
    %57 = vperm.xlu0 %56, %v40
    %v58 = vpop.permute.xlu0 %57
    %v60 = vsub.f32 %v58, %v49
    %v61 = vmul.f32 %v60, %v54
    %v62 = vmul.f32 %v55, %v55
    %v63 = vsub.f32 0.0, %v62
    %v64 = vmul.f32 %v63, 1.442695
    %v65 = vpow.pop %v64
    %v66 = vlaneseq
    %v67 = vshrl.u32 %v66, 7
    %v68 = vsub.s32 0, %v67
    %v69 = vrot.slane %v39, %v68
    %v70 = vmul.f32 %v69, %v65
    %v71 = vand.u32 2147483647, %v55
    %v72 = vmul.f32 %v71, 0.3275911
    %v73 = vadd.f32 %v72, 1.0
    %v74 = vrcp.pop %v73
    %v75 = vmul.f32 %v73, %v74
    %v76 = vsub.f32 2.0, %v75
    %v77 = vmul.f32 %v74, %v76
    %v78 = vmul.f32 %v77, 1.0614054
    %v79 = vadd.f32 %v78, -1.4531521
    %v80 = vmul.f32 %v77, %v79
    %v81 = vadd.f32 %v80, 1.4214138
    %v82 = vmul.f32 %v77, %v81
    %v83 = vadd.f32 %v82, -0.28449672
    %v84 = vmul.f32 %v77, %v83
    %v85 = vadd.f32 %v84, 0.2548296
    %v86 = vmul.f32 %v77, %v85
    %v87 = vmul.f32 %v86, %v65
    %v88 = vsub.f32 1.0, %v87
    %vm89 = vcmp.ge.f32.partialorder %v55, 0.0
    %v90 = vsub.f32 0.0, %v88
    %v91 = vsel %vm89, %v88, %v90
    %v92 = vmul.f32 %v61, %v61
    %v93 = vsub.f32 0.0, %v92
    %v94 = vmul.f32 %v93, 1.442695
    %v95 = vpow.pop %v94
    %v96 = vmul.f32 %v69, %v95
    %v97 = vand.u32 2147483647, %v61
    %v98 = vmul.f32 %v97, 0.3275911
    %v99 = vadd.f32 %v98, 1.0
    %v100 = vrcp.pop %v99
    %v101 = vmul.f32 %v99, %v100
    %v102 = vsub.f32 2.0, %v101
    %v103 = vmul.f32 %v100, %v102
    %v104 = vmul.f32 %v103, 1.0614054
    %v105 = vadd.f32 %v104, -1.4531521
    %v106 = vmul.f32 %v103, %v105
    %v107 = vadd.f32 %v106, 1.4214138
    %v108 = vmul.f32 %v103, %v107
    %v109 = vadd.f32 %v108, -0.28449672
    %v110 = vmul.f32 %v103, %v109
    %v111 = vadd.f32 %v110, 0.2548296
    %v112 = vmul.f32 %v103, %v111
    %v113 = vmul.f32 %v112, %v95
    %v114 = vsub.f32 1.0, %v113
    %vm115 = vcmp.ge.f32.partialorder %v61, 0.0
    %v116 = vsub.f32 0.0, %v114
    %v117 = vsel %vm115, %v114, %v116
    %v118 = vsub.f32 %v91, %v117
    %v119 = vmul.f32 %v118, 0.5
    %v120 = vmul.f32 %v49, %v119
    %v121 = vsub.f32 %v70, %v96
    %v122 = vsub.f32 %v120, %v121
    %v123 = vlaneseq
    %v124 = vshrl.u32 %v123, 7
    %v125 = vsub.s32 0, %v124
    %v126 = vrot.slane %v37, %v125
    %v127 = vmul.f32 %v126, %v119
    %v128 = vadd.f32 %v44, %v49
    %v129 = vmul.f32 %v128, %v70
    %v130 = vadd.f32 %v58, %v49
    %v131 = vmul.f32 %v130, %v96
    %v132 = vsub.f32 %v129, %v131
    %v133 = vsub.f32 %v127, %v132
    %134 = vset.pattern.permute.xlu0 0
    %135 = vperm.xlu0 %134, %v40
    %v136 = vpop.permute.xlu0 %135
    %v138 = vmul.f32 %v136, %v122
    %139 = vset.pattern.permute.xlu0 1
    %140 = vperm.xlu0 %139, %v40
    %v141 = vpop.permute.xlu0 %140
    %v143 = vmul.f32 %v141, %v133
    %v144 = vadd.f32 %v138, %v143
    %145 = vset.pattern.permute.xlu0 2
    %146 = vperm.xlu0 %145, %v40
    %v147 = vpop.permute.xlu0 %146
    %v149 = vmul.f32 %v147, %v119
    %v150 = vsub.f32 %v144, %v149
    %151 = vst [vmem:[#allocation7] sm:$0xff] %v150
    // Predicated region
    $region18: #{tpu_custom_call.1} parent=1 // pred_check
      _
    $region19: #{tpu_custom_call.1} parent=1 // pred_check_branch
      %153 = sbr.rel (0) target = $region21
    $region20: #{tpu_custom_call.1} parent=1 // pred_region
      %s155 = ssub.s32 128, 128
      %156 = vsyncadd [#allocation4], %s155
      %s158 = sshll.u32 [#allocation7], 4
      %s159 = int_to_ptr.vmem [resolvable:$true] %s158
      %161 = dma.vmem_to_hbm [thread:$0]  %s159, 128, %s2, [#allocation4]
    $region21: #{tpu_custom_call.1} parent=1 // pred_fallthru
      _
    // Predicated region
    $region22: #{tpu_custom_call.1} parent=1 // pred_check
      _
    $region23: #{tpu_custom_call.1} parent=1 // pred_check_branch
      %163 = sbr.rel (0) target = $region25
    $region24: #{tpu_custom_call.1} parent=1 // pred_region
      %164 = dma.done [#allocation4], 128
    $region25: #{tpu_custom_call.1} parent=1 // pred_fallthru
      _
    %165 = vsyncpa [#allocation3], 1
    %166 = vsyncpa [#allocation6], 1
    %167 = vsyncpa [#allocation4], 1

</llo_original>
